<compile_context>
chip_gen: v6e
topology: v6e:2x2x1
jax: 0.10.0
libtpu: 0.0.40
codegen_flags: <defaults>
</compile_context>

<pallas_src>
import functools

import jax
import jax.numpy as jnp
from jax import lax
from jax.experimental import pallas as pl
from jax.experimental.pallas import tpu as pltpu


def _round_up(x: int, m: int) -> int:
    return ((x + m - 1) // m) * m


def _ls_kernel(pred_ref, tgt_ref, *rest, smoothing: float, num_classes: int,
               has_weights: bool):
    # pred_ref: (TB, C) native dtype; tgt_ref: (TB, 1) int32;
    # rest = (w_ref, out_ref) if has_weights else (out_ref,)
    if has_weights:
        w_ref, out_ref = rest
    else:
        (out_ref,) = rest

    logits = pred_ref[...].astype(jnp.float32)                      # (TB, C)
    m = jnp.max(logits, axis=-1, keepdims=True)                     # (TB, 1)
    z = logits - m                                                   # (TB, C)
    lse = jnp.log(jnp.sum(jnp.exp(z), axis=-1, keepdims=True))       # (TB, 1)

    conf = 1.0 - smoothing
    smooth = (smoothing / (num_classes - 1)) if num_classes > 1 else 0.0

    # Smooth one-hot never materialized: pick out the target column via iota.
    col = lax.broadcasted_iota(jnp.int32, z.shape, 1)                # (TB, C)
    is_tgt = col == tgt_ref[...]                                     # (TB, C)

    if has_weights:
        w = w_ref[...].astype(jnp.float32)                           # (1, C)
        wz = z * w                                                   # (TB, C)
        wz_t = jnp.sum(jnp.where(is_tgt, wz, 0.0), axis=-1, keepdims=True)
        w_t = jnp.sum(jnp.where(is_tgt, w, 0.0), axis=-1, keepdims=True)
        sum_wz = jnp.sum(wz, axis=-1, keepdims=True)                 # (TB, 1)
        sum_w = jnp.sum(w, axis=-1, keepdims=True)                   # (1, 1)
        out_ref[...] = (-(conf - smooth) * (wz_t - w_t * lse)
                        - smooth * (sum_wz - sum_w * lse))
    else:
        z_t = jnp.sum(jnp.where(is_tgt, z, 0.0), axis=-1, keepdims=True)
        sum_z = jnp.sum(z, axis=-1, keepdims=True)                   # (TB, 1)
        out_ref[...] = (-(conf - smooth) * (z_t - lse)
                        - smooth * (sum_z - float(num_classes) * lse))


def _pick_tile_and_vmem(B: int, C: int, pred_itemsize: int):
    """Pick the row tile TB from a VMEM byte budget + the scoped VMEM limit."""
    try:
        vmem_cap = int(pltpu.get_tpu_info().vmem_capacity_bytes)
    except Exception:
        vmem_cap = 64 << 20  # conservative fallback (v7x per-TC physical)
    vmem_limit = min((vmem_cap * 3) // 4, 112 << 20)

    # Per-row VMEM cost: double-buffered pred tile + ~4 f32 (TB, C) temporaries.
    per_row = 2 * C * pred_itemsize + 4 * C * 4 + 64
    tb = (int(vmem_limit * 0.6) // per_row) // 8 * 8
    tb = max(8, min(tb, 4096))
    tb = min(tb, _round_up(B, 8))
    if B >= 16:  # keep >= 2 grid steps so v7x megacore sharding has work
        tb = min(tb, _round_up(-(-B // 2), 8))
    return tb, int(vmem_limit)


def label_smoothing_loss(pred, target, *, num_classes, smoothing=0.0, dim=1,
                         reduction="mean", class_weights=None):
    """JAX/Pallas port of LabelSmoothingLoss.forward for 2-D (B, C) preds."""
    assert 0 <= smoothing < 1
    assert reduction in ("sum", "mean")
    assert pred.ndim == 2 and dim in (1, -1), "only (B, C) preds with dim=1"
    # TODO(synk): general `dim` aggregation for >2-D preds is not implemented.
    B, C = pred.shape
    assert C == num_classes

    tb, vmem_limit = _pick_tile_and_vmem(B, C, jnp.dtype(pred.dtype).itemsize)
    grid = (pl.cdiv(B, tb),)

    tgt = target.astype(jnp.int32).reshape(B, 1)

    has_weights = class_weights is not None
    kernel = functools.partial(_ls_kernel,
                               smoothing=float(smoothing),
                               num_classes=int(num_classes),
                               has_weights=has_weights)

    in_specs = [
        pl.BlockSpec((tb, C), lambda i: (i, 0)),   # pred row tile (native dtype)
        pl.BlockSpec((tb, 1), lambda i: (i, 0)),   # target indices for the tile
    ]
    operands = [pred, tgt]
    if has_weights:
        w = jnp.asarray(class_weights, dtype=jnp.float32).reshape(1, C)
        in_specs.append(pl.BlockSpec((1, C), lambda i: (0, 0)))  # resident
        operands.append(w)

    per_sample = pl.pallas_call(
        kernel,
        grid=grid,
        in_specs=in_specs,
        out_specs=pl.BlockSpec((tb, 1), lambda i: (i, 0)),
        out_shape=jax.ShapeDtypeStruct((B, 1), jnp.float32),
        compiler_params=pltpu.CompilerParams(
            dimension_semantics=("parallel",),   # megacore sharding on v7x
            vmem_limit_bytes=vmem_limit),
    )(*operands)

    per_sample = per_sample[:, 0]
    if reduction == "mean":
        return jnp.mean(per_sample)
    # The reference module's 'sum' returns the per-sample vector (shape (B,)).
    return per_sample


if __name__ == "__main__":
    key = jax.random.PRNGKey(0)
    k1, k2, k3 = jax.random.split(key, 3)
    B, C = 13, 32            # B deliberately not a tile multiple (no-pad path)
    smoothing = 0.1

    pred = jax.random.normal(k1, (B, C), dtype=jnp.float32)
    target = jax.random.randint(k2, (B,), 0, C)
    cw = jax.random.uniform(k3, (C,), dtype=jnp.float32) + 0.5

    # Path 1: no class weights, 'mean' reduction (default, specialized kernel).
    loss = label_smoothing_loss(pred, target, num_classes=C,
                                smoothing=smoothing, reduction="mean")
    # Path 2: class weights, 'sum' reduction (per-sample vector).
    loss_w = label_smoothing_loss(pred, target, num_classes=C,
                                  smoothing=smoothing, reduction="sum",
                                  class_weights=cw)
    jax.block_until_ready((loss, loss_w))

    # Pure-JAX reference (mirrors the PyTorch module).
    logp = jax.nn.log_softmax(pred, axis=1)
    true_dist = jnp.full((B, C), smoothing / (C - 1), dtype=jnp.float32)
    true_dist = true_dist.at[jnp.arange(B), target].set(1.0 - smoothing)
    ref_per_sample = jnp.sum(-true_dist * logp, axis=1)
    ref_mean = jnp.mean(ref_per_sample)
    ref_w = jnp.sum((-true_dist * logp) * cw[None, :], axis=1)

    assert loss.shape == ()
    assert loss_w.shape == (B,)
    assert jnp.allclose(loss, ref_mean, rtol=1e-5, atol=1e-5)
    assert jnp.allclose(loss_w, ref_w, rtol=1e-5, atol=1e-5)
    print("KERNEL_OK")
</pallas_src>

<mosaic_0001>
module attributes {stable_mosaic.version = 11 : i64} {
  func.func @_ls_kernel(%arg0: i32, %arg1: memref<16x32xf32, #tpu.memory_space<vmem>>, %arg2: memref<16x1xi32, #tpu.memory_space<vmem>>, %arg3: memref<16x1xf32, #tpu.memory_space<vmem>>) attributes {dimension_semantics = [#tpu.dimension_semantics<parallel>], iteration_bounds = array<i64: 1>, scalar_prefetch = 0 : i64, scratch_operands = 0 : i64, tpu.core_type = #tpu.core_type<tc>, window_params = [{transform_indices = @transform_0, window_bounds = array<i64: 16, 32>}, {transform_indices = @transform_1, window_bounds = array<i64: 16, 1>}, {transform_indices = @transform_2, window_bounds = array<i64: 16, 1>}]} {
    %c0 = arith.constant 0 : index
    %c0_0 = arith.constant 0 : index
    %0 = vector.load %arg1[%c0, %c0_0] : memref<16x32xf32, #tpu.memory_space<vmem>>, vector<16x32xf32>
    %cst = arith.constant dense<0xFF800000> : vector<16xf32>
    %1 = vector.multi_reduction <maximumf>, %0, %cst [1] : vector<16x32xf32> to vector<16xf32>
    %2 = vector.shape_cast %1 : vector<16xf32> to vector<16x1xf32>
    %3 = vector.broadcast %2 : vector<16x1xf32> to vector<16x32xf32>
    %4 = arith.subf %0, %3 : vector<16x32xf32>
    %5 = math.exp %4 : vector<16x32xf32>
    %cst_1 = arith.constant dense<0.000000e+00> : vector<16xf32>
    %6 = vector.multi_reduction <add>, %5, %cst_1 [1] : vector<16x32xf32> to vector<16xf32>
    %7 = vector.shape_cast %6 : vector<16xf32> to vector<16x1xf32>
    %8 = math.log %7 : vector<16x1xf32>
    %9 = tpu.iota {dimensions = array<i32: 1>} : vector<16x32xi32>
    %c0_2 = arith.constant 0 : index
    %c0_3 = arith.constant 0 : index
    %10 = vector.load %arg2[%c0_2, %c0_3] : memref<16x1xi32, #tpu.memory_space<vmem>>, vector<16x1xi32>
    %11 = vector.broadcast %10 : vector<16x1xi32> to vector<16x32xi32>
    %12 = arith.cmpi eq, %9, %11 : vector<16x32xi32>
    %cst_4 = arith.constant 0.000000e+00 : f32
    %13 = vector.broadcast %cst_4 : f32 to vector<16x32xf32>
    %14 = arith.select %12, %4, %13 : vector<16x32xi1>, vector<16x32xf32>
    %cst_5 = arith.constant dense<0.000000e+00> : vector<16xf32>
    %15 = vector.multi_reduction <add>, %14, %cst_5 [1] : vector<16x32xf32> to vector<16xf32>
    %16 = vector.shape_cast %15 : vector<16xf32> to vector<16x1xf32>
    %cst_6 = arith.constant dense<0.000000e+00> : vector<16xf32>
    %17 = vector.multi_reduction <add>, %4, %cst_6 [1] : vector<16x32xf32> to vector<16xf32>
    %18 = vector.shape_cast %17 : vector<16xf32> to vector<16x1xf32>
    %19 = arith.subf %16, %8 : vector<16x1xf32>
    %cst_7 = arith.constant -0.896774172 : f32
    %20 = vector.broadcast %cst_7 : f32 to vector<16x1xf32>
    %21 = arith.mulf %20, %19 : vector<16x1xf32>
    %cst_8 = arith.constant 3.200000e+01 : f32
    %22 = vector.broadcast %cst_8 : f32 to vector<16x1xf32>
    %23 = arith.mulf %22, %8 : vector<16x1xf32>
    %24 = arith.subf %18, %23 : vector<16x1xf32>
    %cst_9 = arith.constant 0.0032258064 : f32
    %25 = vector.broadcast %cst_9 : f32 to vector<16x1xf32>
    %26 = arith.mulf %25, %24 : vector<16x1xf32>
    %27 = arith.subf %21, %26 : vector<16x1xf32>
    %c0_10 = arith.constant 0 : index
    %c0_11 = arith.constant 0 : index
    %28 = vector.load %arg3[%c0_10, %c0_11] : memref<16x1xf32, #tpu.memory_space<vmem>>, vector<16x1xf32>
    tpu.vector_store %arg3[%c0_10, %c0_11], %27 {strides = array<i32>} : memref<16x1xf32, #tpu.memory_space<vmem>>, vector<16x1xf32>,
    return
  }
  func.func @transform_0(%arg0: i32) -> (i32, i32) {
    %c0_i32 = arith.constant 0 : i32
    %c0_i32_0 = arith.constant 0 : i32
    return %arg0, %c0_i32 : i32, i32
  }
  func.func @transform_1(%arg0: i32) -> (i32, i32) {
    %c0_i32 = arith.constant 0 : i32
    %c0_i32_0 = arith.constant 0 : i32
    return %arg0, %c0_i32 : i32, i32
  }
  func.func @transform_2(%arg0: i32) -> (i32, i32) {
    %c0_i32 = arith.constant 0 : i32
    %c0_i32_0 = arith.constant 0 : i32
    return %arg0, %c0_i32 : i32, i32
  }
}

</mosaic_0001>

<llo_original>
// kernel: tpu_custom_call.1
$region0: #{tpu_custom_call.1}
  #allocation0 [shape = 'u32[]', space=smem, size = 0x4, offset = 0x4, fixed_abs, tag = 'smem constant byte address 0x4 - core index']
  #allocation1 [shape = 'u32[144,128]{1,0:T(1,128)}', space=vmem, size = 0x12000, scoped, tag = 'internal scratch']
  %s0 = inlined_call_operand.vmem [shape: f32[13,32], index: 0, kind: input, shape index: {}]
  %s1 = inlined_call_operand.vmem [shape: s32[13,1], index: 1, kind: input, shape index: {}]
  %s2 = inlined_call_operand.vmem [shape: f32[13,1], index: 2, kind: output, shape index: {}]
  %s3 = sld [smem:[#allocation0]]
  $region18: #{tpu_custom_call.1} parent=0
    _
  %s5 = ssub.s32 1, %s3
  %s6 = scalar_select 0, %s5, %s3
  // Predicated region
  $region2: #{tpu_custom_call.1} parent=0 // pred_check
    _
  $region3: #{tpu_custom_call.1} parent=0 // pred_check_branch
    %8 = sbr.rel (0) target = $region5
  $region4: #{tpu_custom_call.1} parent=0 // pred_region
    _
  $region5: #{tpu_custom_call.1} parent=0 // pred_fallthru
    _
  // Predicated region
  $region6: #{tpu_custom_call.1} parent=0 // pred_check
    _
  $region7: #{tpu_custom_call.1} parent=0 // pred_check_branch
    %10 = sbr.rel (0) target = $region9
  $region8: #{tpu_custom_call.1} parent=0 // pred_region
    _
  $region9: #{tpu_custom_call.1} parent=0 // pred_fallthru
    _
  %v11 = vld [vmem:[%s0] sm:$0xff]
  %v12 = vld [vmem:[%s0 + $0x8] sm:$0xff]
  %vm13 = vcmask 261120
  %v14 = vsel %vm13, %v11, -inf
  %15 = vmax.xlane.f32.xlu0 %v14
  %v16 = vpop.xlane.xlu0 %15
  %v17 = vsel %vm13, %v12, -inf
  %18 = vmax.xlane.f32.xlu0 %v17
  %v19 = vpop.xlane.xlu0 %18
  %v20 = vsub.f32 %v11, %v16
  %v21 = vsub.f32 %v12, %v19
  %v22 = vmul.f32 %v20, 1.442695
  %v23 = vpow.pop %v22
  %v24 = vmul.f32 %v21, 1.442695
  %v25 = vpow.pop %v24
  %v26 = vsel %vm13, %v23, 0.0
  %27 = vadd.xlane.f32.xlu0 %v26
  %v28 = vpop.xlane.xlu0 %27
  %v29 = vsel %vm13, %v25, 0.0
  %30 = vadd.xlane.f32.xlu0 %v29
  %v31 = vpop.xlane.xlu0 %30
  %v32 = vlog2.pop %v28
  %v33 = vmul.f32 %v32, 0.6931472
  %v34 = vlog2.pop %v31
  %v35 = vmul.f32 %v34, 0.6931472
  %v36 = vlaneseq
  %v37 = vand.u32 %v36, 127
  %v38 = vld [vmem:[%s1] sm:$0xff]
  %v39 = vld [vmem:[%s1 + $0x8] sm:$0xff]
  %40 = vset.pattern.permute.xlu0 0
  %41 = vperm.xlu0 %40, %v38
  %v42 = vpop.permute.xlu0 %41
  %43 = vset.pattern.permute.xlu0 0
  %44 = vperm.xlu0 %43, %v39
  %v45 = vpop.permute.xlu0 %44
  %vm46 = vcmp.eq.s32.totalorder %v37, %v42
  %vm47 = vcmp.eq.s32.totalorder %v37, %v45
  %v48 = vsel %vm46, %v20, 0.0
  %v49 = vsel %vm47, %v21, 0.0
  %v50 = vsel %vm13, %v48, 0.0
  %51 = vadd.xlane.f32.xlu0 %v50
  %v52 = vpop.xlane.xlu0 %51
  %v53 = vsel %vm13, %v49, 0.0
  %54 = vadd.xlane.f32.xlu0 %v53
  %v55 = vpop.xlane.xlu0 %54
  %v56 = vsel %vm13, %v20, 0.0
  %57 = vadd.xlane.f32.xlu0 %v56
  %v58 = vpop.xlane.xlu0 %57
  %v59 = vsel %vm13, %v21, 0.0
  %60 = vadd.xlane.f32.xlu0 %v59
  %v61 = vpop.xlane.xlu0 %60
  %v62 = vsub.f32 %v52, %v33
  %v63 = vsub.f32 %v55, %v35
  %v64 = vmul.f32 %v62, -0.8967742
  %v65 = vmul.f32 %v63, -0.8967742
  %v66 = vmul.f32 %v33, 32.0
  %v67 = vmul.f32 %v35, 32.0
  %v68 = vsub.f32 %v58, %v66
  %v69 = vsub.f32 %v61, %v67
  %v70 = vmul.f32 %v68, 0.0032258064
  %v71 = vmul.f32 %v69, 0.0032258064
  %v72 = vsub.f32 %v64, %v70
  %v73 = vsub.f32 %v65, %v71
  %vm74 = vcmask 7168
  %75 = vst.msk [vmem:[%s2] sm:$0xff] %vm74, %v72
  %76 = vst.msk [vmem:[%s2 + $0x8] sm:$0xff] %vm74, %v73
  // Predicated region
  $region10: #{tpu_custom_call.1} parent=0 // pred_check
    _
  $region11: #{tpu_custom_call.1} parent=0 // pred_check_branch
    %78 = sbr.rel (0) target = $region13
  $region12: #{tpu_custom_call.1} parent=0 // pred_region
    _
  $region13: #{tpu_custom_call.1} parent=0 // pred_fallthru
    _
  // Predicated region
  $region14: #{tpu_custom_call.1} parent=0 // pred_check
    _
  $region15: #{tpu_custom_call.1} parent=0 // pred_check_branch
    %80 = sbr.rel (0) target = $region17
  $region16: #{tpu_custom_call.1} parent=0 // pred_region
    _
  $region17: #{tpu_custom_call.1} parent=0 // pred_fallthru
    _

</llo_original>
